<compile_context>
chip_gen: v6e
topology: v6e:2x2x1
jax: 0.10.0
libtpu: 0.0.40
codegen_flags: <defaults>
</compile_context>

<pallas_src>
import math
import jax
import jax.numpy as jnp
from jax import lax
from jax.experimental import pallas as pl
from jax.experimental.pallas import tpu as pltpu

_SQRT_HALF = 0.7071067811865476  # 1/sqrt(2), hoisted constant


def _linear_gelu_kernel(x_ref, w_ref, b_ref, o_ref):
    # x_ref: (tm, H)  token tile (streams along the inner grid axis)
    # w_ref: (H, tn)  weight slab (resident across the token sweep)
    # b_ref: (1, tn)  f32 bias slab
    # o_ref: (tm, tn) lane-dense output tile
    y = jnp.dot(x_ref[...], w_ref[...], preferred_element_type=jnp.float32)
    y = y + b_ref[...]
    # Exact (erf-based) GELU == torch.nn.GELU() default.  A tanh-approx GELU
    # would route through the (otherwise idle) EUP slot but changes numerics,
    # so the exact form is kept for parity with the PyTorch module.
    o_ref[...] = (0.5 * y * (1.0 + lax.erf(y * _SQRT_HALF))).astype(o_ref.dtype)


def _round_up(a, b):
    return ((a + b - 1) // b) * b


def _vmem_budget_bytes():
    """Usable per-kernel VMEM budget, derived from the device (with headroom)."""
    try:
        cap = pltpu.get_tpu_info().vmem_capacity_bytes
    except Exception:
        cap = 64 * 1024 * 1024  # conservative (v7x-sized) fallback
    # Leave 16 MiB headroom; never ask for more than ~100 MiB even on
    # 128 MiB parts (v5e/v6e) so Mosaic keeps room for its own scratch.
    return min(cap - 16 * 1024 * 1024, 100 * 1024 * 1024)


def _footprint_bytes(tm, tn, H, x_item, w_item, out_item):
    w = H * tn * w_item                  # weight slab, single-buffered
    b = tn * 4                           # bias slab, single-buffered
    x = tm * H * x_item * 2              # streamed token tile, double-buffered
    o = tm * tn * out_item * 2           # output tile, double-buffered
    interm = tm * tn * 4 * 3             # f32 matmul result + GELU temporaries
    return w + b + x + o + interm + (2 << 20)  # + Mosaic scratch headroom


def _choose_tiles(M, H, H_out_pad, x_item, w_item, out_item, budget):
    """Largest (tm, tn) whose footprint fits the VMEM budget."""
    sublane = 16 if x_item == 2 else 8
    tm_pref = max(sublane, min(512, _round_up(max(M, 1), sublane)))
    # tn candidates: multiples of 128 dividing the (already 128-aligned)
    # padded output-feature dim, largest (whole weight resident) first.
    tns = [t for t in range(H_out_pad, 0, -128) if H_out_pad % t == 0]
    for tn in tns:
        tm = tm_pref
        while (_footprint_bytes(tm, tn, H, x_item, w_item, out_item) > budget
               and tm > sublane):
            tm = max(sublane, _round_up(tm // 2, sublane))
        if _footprint_bytes(tm, tn, H, x_item, w_item, out_item) <= budget:
            return tm, tn
    return sublane, 128  # last resort: tiny tiles, still correct


def pack_linear_params(weight, bias, compute_dtype=None):
    """One-time packing of nn.Linear params for linear_dwconv_packed.

    weight: (H_out, H_in) in PyTorch convention; bias: (H_out,).
    Returns (w_packed, b_packed): w_packed (H_in, H_out_pad) [optionally bf16],
    b_packed (1, H_out_pad) f32, with H_out_pad = round_up(H_out, 128).
    Call once at parameter-load time, NOT per forward call.
    """
    H_out, H_in = weight.shape
    H_out_pad = _round_up(H_out, 128)
    w = weight.T                                  # (H_in, H_out): y = x @ w
    if compute_dtype is not None:
        w = w.astype(compute_dtype)
    b = bias.astype(jnp.float32)
    if H_out_pad != H_out:
        w = jnp.pad(w, ((0, 0), (0, H_out_pad - H_out)))
        b = jnp.pad(b, (0, H_out_pad - H_out))
    return w, b.reshape(1, H_out_pad)


def linear_dwconv_packed(x, w_packed, b_packed):
    """y = GELU(x @ w_packed + b_packed)[..., :H] with pre-packed params."""
    orig_shape = x.shape
    H = orig_shape[-1]
    H_in, H_out_pad = w_packed.shape
    assert H_in == H, "packed weight does not match x's feature dim"
    out_dtype = x.dtype
    compute_dtype = w_packed.dtype

    x2d = x.reshape(-1, H).astype(compute_dtype)  # cast is a no-op on f32 path
    M = x2d.shape[0]

    x_item = jnp.dtype(compute_dtype).itemsize
    w_item = x_item
    out_item = jnp.dtype(out_dtype).itemsize
    budget = _vmem_budget_bytes()
    tm, tn = _choose_tiles(M, H, H_out_pad, x_item, w_item, out_item, budget)

    n_i = pl.cdiv(M, tm)          # token tiles (ragged last block is masked)
    n_j = H_out_pad // tn         # output-feature slabs

    resident = pl.Buffered(1)     # weight/bias index is constant along the
                                  # inner axis -> single-buffer them

    if n_j == 1:
        # Whole weight resident in VMEM.  A single (token) grid axis keeps
        # the leading parallel axis populated for both TensorCores on v7x.
        grid = (n_i,)
        in_specs = [
            pl.BlockSpec((tm, H), lambda i: (i, 0)),                          # x streams
            pl.BlockSpec((H, tn), lambda i: (0, 0), pipeline_mode=resident),  # W resident
            pl.BlockSpec((1, tn), lambda i: (0, 0), pipeline_mode=resident),  # bias
        ]
        out_spec = pl.BlockSpec((tm, tn), lambda i: (i, 0))
        dim_sem = ("parallel",)
    else:
        # Features OUTER / tokens INNER: the (H, tn) weight slab stays
        # resident across the whole M sweep and is read from HBM only once.
        grid = (n_j, n_i)
        in_specs = [
            pl.BlockSpec((tm, H), lambda j, i: (i, 0)),
            pl.BlockSpec((H, tn), lambda j, i: (0, j), pipeline_mode=resident),
            pl.BlockSpec((1, tn), lambda j, i: (0, j), pipeline_mode=resident),
        ]
        out_spec = pl.BlockSpec((tm, tn), lambda j, i: (i, j))
        dim_sem = ("parallel", "parallel")

    fp = _footprint_bytes(tm, tn, H, x_item, w_item, out_item)
    vmem_limit = int(min(budget, max(fp + (8 << 20), 32 << 20)))

    out = pl.pallas_call(
        _linear_gelu_kernel,
        out_shape=jax.ShapeDtypeStruct((M, H_out_pad), out_dtype),
        grid=grid,
        in_specs=in_specs,
        out_specs=out_spec,
        compiler_params=pltpu.CompilerParams(
            dimension_semantics=dim_sem,
            vmem_limit_bytes=vmem_limit,
        ),
    )(x2d, w_packed, b_packed)

    if H_out_pad != H:
        out = out[:, :H]
    return out.reshape(orig_shape)


def linear_dwconv(x, weight, bias, *, compute_dtype=None):
    """Convenience wrapper: y = GELU(x @ weight.T + bias) over the last axis.

    weight: (H, H) in PyTorch nn.Linear convention (out, in); bias: (H,).
    For repeated calls, prefer pack_linear_params() once + linear_dwconv_packed().
    """
    w_packed, b_packed = pack_linear_params(weight, bias, compute_dtype)
    return linear_dwconv_packed(x, w_packed, b_packed)


def _reference(x, weight, bias):
    y = jnp.einsum("...i,oi->...o", x, weight) + bias
    return 0.5 * y * (1.0 + lax.erf(y / jnp.sqrt(2.0)))


if __name__ == "__main__":
    B, N, H = 2, 8, 32  # batch, seq, hidden_features

    key = jax.random.PRNGKey(0)
    kx, kw, kb = jax.random.split(key, 3)

    x = jax.random.normal(kx, (B, N, H), dtype=jnp.float32)

    # Deterministic parameters matching nn.Linear's shapes: weight (H, H),
    # bias (H,), uniform in +/- 1/sqrt(H).
    bound = 1.0 / math.sqrt(H)
    weight = jax.random.uniform(kw, (H, H), jnp.float32, -bound, bound)
    bias = jax.random.uniform(kb, (H,), jnp.float32, -bound, bound)

    ref = _reference(x, weight, bias)

    # Exact-semantics (f32) path: pack once, then call the packed kernel.
    w_packed, b_packed = pack_linear_params(weight, bias)
    out = jax.block_until_ready(linear_dwconv_packed(x, w_packed, b_packed))
    assert out.shape == (B, N, H)
    assert out.dtype == x.dtype
    assert jnp.allclose(out, ref, atol=1e-5, rtol=1e-5), "f32 path mismatch vs reference"

    # bf16 compute path (memory-bound fast path); accumulation stays f32,
    # so only input/weight quantization error remains -> loose tolerance.
    out_bf16 = jax.block_until_ready(
        linear_dwconv(x, weight, bias, compute_dtype=jnp.bfloat16))
    assert out_bf16.shape == (B, N, H)
    assert jnp.allclose(out_bf16, ref, atol=5e-2, rtol=5e-2), "bf16 path mismatch vs reference"

    print("KERNEL_OK")
</pallas_src>

<mosaic_0001>
module attributes {stable_mosaic.version = 11 : i64} {
  func.func @_linear_gelu_kernel(%arg0: i32, %arg1: memref<16x32xf32, #tpu.memory_space<vmem>>, %arg2: memref<32x128xf32, #tpu.memory_space<vmem>>, %arg3: memref<1x128xf32, #tpu.memory_space<vmem>>, %arg4: memref<16x128xf32, #tpu.memory_space<vmem>>) attributes {dimension_semantics = [#tpu.dimension_semantics<parallel>], iteration_bounds = array<i64: 1>, scalar_prefetch = 0 : i64, scratch_operands = 0 : i64, tpu.core_type = #tpu.core_type<tc>, window_params = [{transform_indices = @transform_0, window_bounds = array<i64: 16, 32>}, {pipeline_mode = #tpu.pipeline_mode<synchronous>, transform_indices = @transform_1, window_bounds = array<i64: 32, 128>}, {pipeline_mode = #tpu.pipeline_mode<synchronous>, transform_indices = @transform_2, window_bounds = array<i64: 1, 128>}, {transform_indices = @transform_3, window_bounds = array<i64: 16, 128>}]} {
    %c0 = arith.constant 0 : index
    %c0_0 = arith.constant 0 : index
    %0 = vector.load %arg1[%c0, %c0_0] : memref<16x32xf32, #tpu.memory_space<vmem>>, vector<16x32xf32>
    %c0_1 = arith.constant 0 : index
    %c0_2 = arith.constant 0 : index
    %1 = vector.load %arg2[%c0_1, %c0_2] : memref<32x128xf32, #tpu.memory_space<vmem>>, vector<32x128xf32>
    %cst = arith.constant dense<0.000000e+00> : vector<16x128xf32>
    %2 = tpu.matmul %0, %1, %cst {dimension_numbers = #tpu.dot_dimension_numbers<[1], [0], [0], [1], [0, 0, 1, 1], [], []>} : vector<16x32xf32>, vector<32x128xf32>, vector<16x128xf32> -> vector<16x128xf32>
    %c0_3 = arith.constant 0 : index
    %c0_4 = arith.constant 0 : index
    %3 = vector.load %arg3[%c0_3, %c0_4] : memref<1x128xf32, #tpu.memory_space<vmem>>, vector<1x128xf32>
    %4 = vector.broadcast %3 : vector<1x128xf32> to vector<16x128xf32>
    %5 = arith.addf %2, %4 : vector<16x128xf32>
    %cst_5 = arith.constant 5.000000e-01 : f32
    %6 = vector.broadcast %cst_5 : f32 to vector<16x128xf32>
    %7 = arith.mulf %6, %5 : vector<16x128xf32>
    %cst_6 = arith.constant 0.707106769 : f32
    %8 = vector.broadcast %cst_6 : f32 to vector<16x128xf32>
    %9 = arith.mulf %5, %8 : vector<16x128xf32>
    %10 = math.erf %9 : vector<16x128xf32>
    %cst_7 = arith.constant 1.000000e+00 : f32
    %11 = vector.broadcast %cst_7 : f32 to vector<16x128xf32>
    %12 = arith.addf %11, %10 : vector<16x128xf32>
    %13 = arith.mulf %7, %12 : vector<16x128xf32>
    %c0_8 = arith.constant 0 : index
    %c0_9 = arith.constant 0 : index
    %14 = vector.load %arg4[%c0_8, %c0_9] : memref<16x128xf32, #tpu.memory_space<vmem>>, vector<16x128xf32>
    tpu.vector_store %arg4[%c0_8, %c0_9], %13 {strides = array<i32>} : memref<16x128xf32, #tpu.memory_space<vmem>>, vector<16x128xf32>,
    return
  }
  func.func @transform_0(%arg0: i32) -> (i32, i32) {
    %c0_i32 = arith.constant 0 : i32
    %c0_i32_0 = arith.constant 0 : i32
    return %arg0, %c0_i32 : i32, i32
  }
  func.func @transform_1(%arg0: i32) -> (i32, i32) {
    %c0_i32 = arith.constant 0 : i32
    %c0_i32_0 = arith.constant 0 : i32
    %c0_i32_1 = arith.constant 0 : i32
    return %c0_i32, %c0_i32_0 : i32, i32
  }
  func.func @transform_2(%arg0: i32) -> (i32, i32) {
    %c0_i32 = arith.constant 0 : i32
    %c0_i32_0 = arith.constant 0 : i32
    %c0_i32_1 = arith.constant 0 : i32
    return %c0_i32, %c0_i32_0 : i32, i32
  }
  func.func @transform_3(%arg0: i32) -> (i32, i32) {
    %c0_i32 = arith.constant 0 : i32
    %c0_i32_0 = arith.constant 0 : i32
    return %arg0, %c0_i32 : i32, i32
  }
}

</mosaic_0001>

<llo_original>
// kernel: tpu_custom_call.1
$region0: #{tpu_custom_call.1}
  #allocation0 [shape = 'u32[]', space=smem, size = 0x4, offset = 0x4, fixed_abs, tag = 'smem constant byte address 0x4 - core index']
  #allocation1 [shape = 'u32[144,128]{1,0:T(1,128)}', space=vmem, size = 0x12000, scoped, tag = 'internal scratch']
  %s0 = inlined_call_operand.hbm [shape: f32[16,32], index: 0, kind: input, shape index: {}]
  %s1 = inlined_call_operand.hbm [shape: f32[32,128], index: 1, kind: input, shape index: {}]
  %s2 = inlined_call_operand.vmem [shape: f32[1,128], index: 2, kind: input, shape index: {}]
  %s3 = inlined_call_operand.hbm [shape: f32[16,128], index: 3, kind: output, shape index: {}]
  %s4 = sld [smem:[#allocation0]]
  $region30: #{tpu_custom_call.1} parent=0
    _
  %s6 = ssub.s32 1, %s4
  %s7 = scalar_select 0, %s6, %s4
  $region1: #{tpu_custom_call.1} parent=0
    #allocation2 [shape = 'u8[8192]{0}', space=vmem, size = 0x2000, scoped, tag = 'input window, operand 0, single buffered']
    #allocation3 [shape = 's32[1]{0}', space=sflag, size = 0x4, scoped, tag = 'scoped memory for tpu_custom_call.1']
    #allocation4 [shape = 's32[1]{0}', space=sflag, size = 0x4, scoped, tag = 'scoped memory for tpu_custom_call.1']
    #allocation5 [shape = 'u8[16384]{0}', space=vmem, size = 0x4000, scoped, tag = 'input window, operand 1, single buffered']
    #allocation6 [shape = 's32[1]{0}', space=sflag, size = 0x4, scoped, tag = 'scoped memory for tpu_custom_call.1']
    #allocation7 [shape = 'u8[8192]{0}', space=vmem, size = 0x2000, scoped, tag = 'output window, operand 0, single buffered']
    %8 = vsyncpa [#allocation3], 0
    %9 = vsyncpa [#allocation6], 0
    %10 = vsyncpa [#allocation4], 0
    // Predicated region
    $region2: #{tpu_custom_call.1} parent=1 // pred_check
      _
    $region3: #{tpu_custom_call.1} parent=1 // pred_check_branch
      %12 = sbr.rel (0) target = $region5
    $region4: #{tpu_custom_call.1} parent=1 // pred_region
      %s14 = ssub.s32 256, 256
      %15 = vsyncadd [#allocation3], %s14
      %s16 = sshll.u32 [#allocation2], 4
      %s17 = int_to_ptr.vmem [resolvable:$true] %s16
      %22 = dma.hbm_to_vmem [thread:$0]  %s0, 256, %s17, [#allocation3], 128, 128, 8
    $region5: #{tpu_custom_call.1} parent=1 // pred_fallthru
      _
    // Predicated region
    $region6: #{tpu_custom_call.1} parent=1 // pred_check
      _
    $region7: #{tpu_custom_call.1} parent=1 // pred_check_branch
      %24 = sbr.rel (0) target = $region9
    $region8: #{tpu_custom_call.1} parent=1 // pred_region
      %s26 = ssub.s32 512, 512
      %27 = vsyncadd [#allocation6], %s26
      %s28 = sshll.u32 [#allocation5], 4
      %s29 = int_to_ptr.vmem [resolvable:$true] %s28
      %34 = dma.hbm_to_vmem [thread:$0]  %s1, 512, %s29, [#allocation6], 128, 128, 8
    $region9: #{tpu_custom_call.1} parent=1 // pred_fallthru
      _
    // Predicated region
    $region10: #{tpu_custom_call.1} parent=1 // pred_check
      _
    $region11: #{tpu_custom_call.1} parent=1 // pred_check_branch
      %36 = sbr.rel (0) target = $region13
    $region12: #{tpu_custom_call.1} parent=1 // pred_region
      _
    $region13: #{tpu_custom_call.1} parent=1 // pred_fallthru
      _
    // Predicated region
    $region14: #{tpu_custom_call.1} parent=1 // pred_check
      _
    $region15: #{tpu_custom_call.1} parent=1 // pred_check_branch
      %38 = sbr.rel (0) target = $region17
    $region16: #{tpu_custom_call.1} parent=1 // pred_region
      %39 = dma.done [#allocation3], 256
    $region17: #{tpu_custom_call.1} parent=1 // pred_fallthru
      _
    // Predicated region
    $region18: #{tpu_custom_call.1} parent=1 // pred_check
      _
    $region19: #{tpu_custom_call.1} parent=1 // pred_check_branch
      %41 = sbr.rel (0) target = $region21
    $region20: #{tpu_custom_call.1} parent=1 // pred_region
      %42 = dma.done [#allocation6], 512
    $region21: #{tpu_custom_call.1} parent=1 // pred_fallthru
      _
    %v43 = vld [vmem:[#allocation2] sm:$0xff]
    %v44 = vld [vmem:[#allocation2 + $0x8] sm:$0xff]
    %v45 = vld [vmem:[#allocation5] sm:$0xff]
    %v46 = vld [vmem:[#allocation5 + $0x8] sm:$0xff]
    %v47 = vld [vmem:[#allocation5 + $0x10] sm:$0xff]
    %v48 = vld [vmem:[#allocation5 + $0x18] sm:$0xff]
    %v49 = vld [vmem:[%s2] sm:$0x1]
    %v51 = vlaneseq
    %v52 = vshrl.u32 %v51, 7
    %v53 = vsub.s32 0, %v52
    %v54 = vrot.slane %v49, %v53
    %vm56 = vcmask 261120
    %v58 = vsel %vm56, %v43, 0
    %v61 = vsel %vm56, %v44, 0
    %63 = vmatprep.subr.mxu0 0.0
    %64 = vmatpush1.msra.mxu0 0.0
    %65 = vmatprep.subr.mxu0 0.0
    %66 = vmatpush1.msra.mxu0 0.0
    %67 = vmatprep.subr.mxu0 0.0
    %68 = vmatpush1.msra.mxu0 0.0
    %69 = vmatprep.subr.mxu0 0.0
    %70 = vmatpush1.msra.mxu0 0.0
    %71 = vmatprep.subr.mxu0 0.0
    %72 = vmatpush1.msra.mxu0 0.0
    %73 = vmatprep.subr.mxu0 0.0
    %74 = vmatpush1.msra.mxu0 0.0
    %75 = vmatprep.subr.mxu0 0.0
    %76 = vmatpush1.msra.mxu0 0.0
    %77 = vmatprep.subr.mxu0 0.0
    %78 = vmatpush1.msra.mxu0 0.0
    %79 = vmatprep.subr.mxu0 0.0
    %80 = vmatpush1.msra.mxu0 0.0
    %81 = vmatprep.subr.mxu0 0.0
    %82 = vmatpush1.msra.mxu0 0.0
    %83 = vmatprep.subr.mxu0 0.0
    %84 = vmatpush1.msra.mxu0 0.0
    %85 = vmatprep.subr.mxu0 0.0
    %86 = vmatpush1.msra.mxu0 0.0
    %87 = vmatprep.subr.mxu0 0.0
    %88 = vmatpush1.msra.mxu0 %v48
    %89 = vmatprep.subr.mxu0 0.0
    %90 = vmatpush1.msra.mxu0 %v47
    %91 = vmatprep.subr.mxu0 0.0
    %92 = vmatpush1.msra.mxu0 %v46
    %93 = vmatprep.subr.mxu0 0.0
    %94 = vmatpush1.msra.mxu0 %v45
    %95 = vmatprep.subr.mxu0 0.0
    %96 = vmatpush2.msra.mxu0 0.0
    %97 = vmatprep.subr.mxu0 0.0
    %98 = vmatpush2.msra.mxu0 0.0
    %99 = vmatprep.subr.mxu0 0.0
    %100 = vmatpush2.msra.mxu0 0.0
    %101 = vmatprep.subr.mxu0 0.0
    %102 = vmatpush2.msra.mxu0 0.0
    %103 = vmatprep.subr.mxu0 0.0
    %104 = vmatpush2.msra.mxu0 0.0
    %105 = vmatprep.subr.mxu0 0.0
    %106 = vmatpush2.msra.mxu0 0.0
    %107 = vmatprep.subr.mxu0 0.0
    %108 = vmatpush2.msra.mxu0 0.0
    %109 = vmatprep.subr.mxu0 0.0
    %110 = vmatpush2.msra.mxu0 0.0
    %111 = vmatprep.subr.mxu0 0.0
    %112 = vmatpush2.msra.mxu0 0.0
    %113 = vmatprep.subr.mxu0 0.0
    %114 = vmatpush2.msra.mxu0 0.0
    %115 = vmatprep.subr.mxu0 0.0
    %116 = vmatpush2.msra.mxu0 0.0
    %117 = vmatprep.subr.mxu0 0.0
    %118 = vmatpush2.msra.mxu0 0.0
    %119 = vmatprep.subr.mxu0 0.0
    %120 = vmatpush2.msra.mxu0 0.0
    %121 = vmatprep.subr.mxu0 0.0
    %122 = vmatpush2.msra.mxu0 0.0
    %123 = vmatprep.subr.mxu0 0.0
    %124 = vmatpush2.msra.mxu0 0.0
    %125 = vmatprep.subr.mxu0 0.0
    %126 = vmatpush2.msra.mxu0 0.0
    %127 = vmatprep.mubr.f32.mxu0 0.0
    %128 = vmatmul.mubr.f32.gmra.mxu0 %v58
    %v129 = vpop.f32.mrf.mxu0
    %v130 = vadd.f32 %v54, %v129
    %v131 = vpop.f32.mrf.mxu0
    %132 = vmatprep.mubr.f32.mxu0 0.0
    %133 = vmatmul.mubr.f32.gmra.mxu0 %v61
    %v134 = vpop.f32.mrf.mxu0
    %v135 = vadd.f32 %v54, %v134
    %v136 = vpop.f32.mrf.mxu0
    %137 = vdwg.mxu0
    %v138 = vmul.f32 %v130, 0.5
    %v139 = vmul.f32 %v135, 0.5
    %v140 = vmul.f32 %v130, 0.70710677
    %v141 = vmul.f32 %v135, 0.70710677
    %v142 = verf.f32.pop %v140
    %v143 = verf.f32.pop %v141
    %v144 = vadd.f32 %v142, 1.0
    %v145 = vadd.f32 %v143, 1.0
    %v146 = vmul.f32 %v138, %v144
    %v147 = vmul.f32 %v139, %v145
    %148 = vst [vmem:[#allocation7] sm:$0xff] %v146
    %149 = vst [vmem:[#allocation7 + $0x8] sm:$0xff] %v147
    // Predicated region
    $region22: #{tpu_custom_call.1} parent=1 // pred_check
      _
    $region23: #{tpu_custom_call.1} parent=1 // pred_check_branch
      %151 = sbr.rel (0) target = $region25
    $region24: #{tpu_custom_call.1} parent=1 // pred_region
      %s153 = ssub.s32 256, 256
      %154 = vsyncadd [#allocation4], %s153
      %s155 = sshll.u32 [#allocation7], 4
      %s156 = int_to_ptr.vmem [resolvable:$true] %s155
      %161 = dma.vmem_to_hbm [thread:$0]  %s156, 256, %s3, [#allocation4], 128, 128, 8
    $region25: #{tpu_custom_call.1} parent=1 // pred_fallthru
      _
    // Predicated region
    $region26: #{tpu_custom_call.1} parent=1 // pred_check
      _
    $region27: #{tpu_custom_call.1} parent=1 // pred_check_branch
      %163 = sbr.rel (0) target = $region29
    $region28: #{tpu_custom_call.1} parent=1 // pred_region
      %164 = dma.done [#allocation4], 256
    $region29: #{tpu_custom_call.1} parent=1 // pred_fallthru
      _
    %165 = vsyncpa [#allocation3], 1
    %166 = vsyncpa [#allocation6], 1
    %167 = vsyncpa [#allocation4], 1

</llo_original>
